<compile_context>
chip_gen: v7x
topology: tpu7x:2x2x1
jax: 0.10.0
libtpu: 0.0.40
codegen_flags: <defaults>
</compile_context>

<pallas_src>
import math
import jax
import jax.numpy as jnp
from jax.experimental import pallas as pl
from jax.experimental.pallas import tpu as pltpu


def _round_up(x, m):
    return ((x + m - 1) // m) * m


def _num_grid_steps(batch):
    """1 grid step on single-TC chips; 2 on v7x (dual TC) for large batches."""
    try:
        kind = jax.devices()[0].device_kind.lower()
    except Exception:
        kind = ""
    if "v7" in kind and batch >= 512:
        return 2
    return 1


def qnet_kernel(x_ref, w1_ref, b1_ref, w2_ref, b2_ref, w3_ref, b3_ref, o_ref):
    # Feature-major: x is [S+A, tb]; weights are torch-layout [out, in].
    # fc1 + ReLU:  h1 = relu(W1 @ x + b1)              -> [H0, tb]
    h1 = jnp.dot(w1_ref[...], x_ref[...], preferred_element_type=jnp.float32)
    h1 = jnp.maximum(h1 + b1_ref[...], 0.0)                       # f32 epilogue

    # fc2 + ReLU:  h2 = relu(W2 @ h1 + b2)             -> [H1, tb]
    h2 = jnp.dot(w2_ref[...], h1.astype(w2_ref.dtype),
                 preferred_element_type=jnp.float32)
    h2 = jnp.maximum(h2 + b2_ref[...], 0.0)                       # f32 epilogue

    # fc_mean: [1, H1] matmul as multiply + sublane reduce (VPU/XLU, not MXU);
    # result is already lane-dense (1, tb).
    out = jnp.sum(h2 * w3_ref[...], axis=0, keepdims=True)        # [1, tb]
    o_ref[...] = (out + b3_ref[...]).astype(o_ref.dtype)


def q_network_forward(state, action, params, *, grid_steps=None):
    """state: [B, S], action: [B, A] -> q: [B, 1] (f32).

    `params` are expected pre-cast to the desired compute dtype (see
    init_q_network / cast_params) so no weight casts happen per call.
    """
    w1, b1, w2, b2, w3, b3 = params
    cd = w1.dtype
    B, S = state.shape
    A = action.shape[1]
    SA = S + A
    H0 = w1.shape[0]
    H1 = w2.shape[0]

    if grid_steps is None:
        grid_steps = _num_grid_steps(B)
    if B < 128 * grid_steps:
        grid_steps = 1

    # Lane-aligned batch tile (batch lives on the 128-lane axis now).
    tb = _round_up(pl.cdiv(B, grid_steps), 128)
    Bp = tb * grid_steps

    # Pack [state|action] once, feature-major, compute dtype: [S+A, Bp].
    # (One small fused XLA op per call; the concat/transpose would otherwise be
    # lane-sparse work inside the kernel.)
    x_t = jnp.concatenate([state, action], axis=1).T.astype(cd)
    if Bp != B:
        x_t = jnp.pad(x_t, ((0, 0), (0, Bp - B)))

    resident = lambda arr: pl.BlockSpec(arr.shape, lambda i: (0,) * arr.ndim)

    itemsize = jnp.dtype(cd).itemsize
    weight_bytes = (SA * H0 + H0 * H1) * itemsize + (H0 + H1 + H1 + 1) * 4
    cost = pl.CostEstimate(
        flops=2 * Bp * (SA * H0 + H0 * H1 + H1),
        transcendentals=0,
        bytes_accessed=Bp * SA * itemsize + Bp * 4 + weight_bytes,
    )

    out = pl.pallas_call(
        qnet_kernel,
        out_shape=jax.ShapeDtypeStruct((1, Bp), jnp.float32),
        grid_spec=pltpu.PrefetchScalarGridSpec(
            num_scalar_prefetch=0,
            grid=(grid_steps,),
            in_specs=[
                pl.BlockSpec((SA, tb), lambda i: (0, i)),   # batch-tiled input
                resident(w1), resident(b1),                 # VMEM-resident weights
                resident(w2), resident(b2),
                resident(w3), resident(b3),
            ],
            out_specs=pl.BlockSpec((1, tb), lambda i: (0, i)),  # lane-dense output
        ),
        compiler_params=pltpu.CompilerParams(
            dimension_semantics=("parallel",),
        ),
        cost_estimate=cost,
    )(x_t, w1, b1, w2, b2, w3, b3)

    return out[0, :B].reshape(B, 1)


def xavier_uniform(key, out_features, in_features, gain=1.0):
    # matches torch.nn.init.xavier_uniform_ (gain=1); torch layout [out, in]
    limit = gain * math.sqrt(6.0 / (in_features + out_features))
    return jax.random.uniform(key, (out_features, in_features), dtype=jnp.float32,
                              minval=-limit, maxval=limit)


def init_q_network(key, state_size, action_size, hidden_sizes,
                   compute_dtype=jnp.float32):
    """Weights in torch layout [out, in] (feature-major kernel uses them as-is).
    MXU weights stored in `compute_dtype`; biases / final row stay f32."""
    in_dim = state_size + action_size
    h0, h1 = hidden_sizes
    k1, k2, k3 = jax.random.split(key, 3)
    cd = jnp.dtype(compute_dtype)
    w1 = xavier_uniform(k1, h0, in_dim).astype(cd)        # [H0, S+A]
    b1 = jnp.zeros((h0, 1), jnp.float32)
    w2 = xavier_uniform(k2, h1, h0).astype(cd)             # [H1, H0]
    b2 = jnp.zeros((h1, 1), jnp.float32)
    w3 = xavier_uniform(k3, 1, h1).reshape(h1, 1)          # column form, f32 (VPU)
    b3 = jnp.zeros((1, 1), jnp.float32)
    return (w1, b1, w2, b2, w3, b3)


def cast_params(params, compute_dtype):
    """One-off cast of the MXU weight operands (hoisted out of the hot path)."""
    w1, b1, w2, b2, w3, b3 = params
    cd = jnp.dtype(compute_dtype)
    return (w1.astype(cd), b1, w2.astype(cd), b2, w3, b3)


def _reference(state, action, params_f32):
    w1, b1, w2, b2, w3, b3 = params_f32
    x = jnp.concatenate([state, action], axis=1)
    h = jnp.maximum(x @ w1.astype(jnp.float32).T + b1.T, 0.0)
    h = jnp.maximum(h @ w2.astype(jnp.float32).T + b2.T, 0.0)
    return h @ w3 + b3.T


if __name__ == "__main__":
    state_size, action_size = 8, 4
    hidden_sizes = (32, 32)

    key = jax.random.PRNGKey(0)
    kp, ks, ka = jax.random.split(key, 3)
    params_f32 = init_q_network(kp, state_size, action_size, hidden_sizes,
                                compute_dtype=jnp.float32)
    params_bf16 = cast_params(params_f32, jnp.bfloat16)   # cached, cast once

    # --- small batch (single grid step), f32, strict check ---
    batch = 8
    state = jax.random.normal(ks, (batch, state_size), dtype=jnp.float32)
    action = jax.random.normal(ka, (batch, action_size), dtype=jnp.float32)
    q = q_network_forward(state, action, params_f32)
    jax.block_until_ready(q)
    ref = _reference(state, action, params_f32)
    assert q.shape == (batch, 1)
    assert jnp.allclose(q, ref, atol=1e-5, rtol=1e-5)

    # --- larger, non-multiple batch: default (auto) grid ---
    batch2 = 1000
    ks2, ka2 = jax.random.split(jax.random.PRNGKey(1))
    state2 = jax.random.normal(ks2, (batch2, state_size), dtype=jnp.float32)
    action2 = jax.random.normal(ka2, (batch2, action_size), dtype=jnp.float32)
    q2 = q_network_forward(state2, action2, params_f32)
    jax.block_until_ready(q2)
    ref2 = _reference(state2, action2, params_f32)
    assert q2.shape == (batch2, 1)
    assert jnp.allclose(q2, ref2, atol=1e-5, rtol=1e-5)

    # --- explicit 2-step grid (exercises batch pipelining / v7x path) ---
    q2b = q_network_forward(state2, action2, params_f32, grid_steps=2)
    jax.block_until_ready(q2b)
    assert jnp.allclose(q2b, ref2, atol=1e-5, rtol=1e-5)

    # --- bf16 MXU operands (pre-cast params), f32 accumulation, loose check ---
    q3 = q_network_forward(state2, action2, params_bf16)
    jax.block_until_ready(q3)
    assert jnp.allclose(q3, ref2, atol=5e-2, rtol=5e-2)

    print("KERNEL_OK")
</pallas_src>

<mosaic_0001>
module attributes {stable_mosaic.version = 11 : i64} {
  func.func @qnet_kernel(%arg0: i32, %arg1: memref<12x128xf32, #tpu.memory_space<vmem>>, %arg2: memref<32x12xf32, #tpu.memory_space<vmem>>, %arg3: memref<32x1xf32, #tpu.memory_space<vmem>>, %arg4: memref<32x32xf32, #tpu.memory_space<vmem>>, %arg5: memref<32x1xf32, #tpu.memory_space<vmem>>, %arg6: memref<32x1xf32, #tpu.memory_space<vmem>>, %arg7: memref<1x1xf32, #tpu.memory_space<vmem>>, %arg8: memref<1x128xf32, #tpu.memory_space<vmem>>) attributes {dimension_semantics = [#tpu.dimension_semantics<parallel>], iteration_bounds = array<i64: 1>, scalar_prefetch = 0 : i64, scratch_operands = 0 : i64, tpu.core_type = #tpu.core_type<tc>, window_params = [{transform_indices = @transform_0, window_bounds = array<i64: 12, 128>}, {pipeline_mode = #tpu.pipeline_mode<synchronous>, transform_indices = @transform_1, window_bounds = array<i64: 32, 12>}, {pipeline_mode = #tpu.pipeline_mode<synchronous>, transform_indices = @transform_2, window_bounds = array<i64: 32, 1>}, {pipeline_mode = #tpu.pipeline_mode<synchronous>, transform_indices = @transform_3, window_bounds = array<i64: 32, 32>}, {pipeline_mode = #tpu.pipeline_mode<synchronous>, transform_indices = @transform_4, window_bounds = array<i64: 32, 1>}, {pipeline_mode = #tpu.pipeline_mode<synchronous>, transform_indices = @transform_5, window_bounds = array<i64: 32, 1>}, {pipeline_mode = #tpu.pipeline_mode<synchronous>, transform_indices = @transform_6, window_bounds = array<i64: 1, 1>}, {transform_indices = @transform_7, window_bounds = array<i64: 1, 128>}]} {
    %c0 = arith.constant 0 : index
    %c0_0 = arith.constant 0 : index
    %0 = vector.load %arg2[%c0, %c0_0] : memref<32x12xf32, #tpu.memory_space<vmem>>, vector<32x12xf32>
    %c0_1 = arith.constant 0 : index
    %c0_2 = arith.constant 0 : index
    %1 = vector.load %arg1[%c0_1, %c0_2] : memref<12x128xf32, #tpu.memory_space<vmem>>, vector<12x128xf32>
    %cst = arith.constant dense<0.000000e+00> : vector<32x128xf32>
    %2 = tpu.matmul %0, %1, %cst {dimension_numbers = #tpu.dot_dimension_numbers<[1], [0], [0], [1], [0, 0, 1, 1], [], []>} : vector<32x12xf32>, vector<12x128xf32>, vector<32x128xf32> -> vector<32x128xf32>
    %c0_3 = arith.constant 0 : index
    %c0_4 = arith.constant 0 : index
    %3 = vector.load %arg3[%c0_3, %c0_4] : memref<32x1xf32, #tpu.memory_space<vmem>>, vector<32x1xf32>
    %4 = vector.broadcast %3 : vector<32x1xf32> to vector<32x128xf32>
    %5 = arith.addf %2, %4 : vector<32x128xf32>
    %cst_5 = arith.constant 0.000000e+00 : f32
    %6 = vector.broadcast %cst_5 : f32 to vector<32x128xf32>
    %7 = arith.maximumf %5, %6 : vector<32x128xf32>
    %c0_6 = arith.constant 0 : index
    %c0_7 = arith.constant 0 : index
    %8 = vector.load %arg4[%c0_6, %c0_7] : memref<32x32xf32, #tpu.memory_space<vmem>>, vector<32x32xf32>
    %cst_8 = arith.constant dense<0.000000e+00> : vector<32x128xf32>
    %9 = tpu.matmul %8, %7, %cst_8 {dimension_numbers = #tpu.dot_dimension_numbers<[1], [0], [0], [1], [0, 0, 1, 1], [], []>} : vector<32x32xf32>, vector<32x128xf32>, vector<32x128xf32> -> vector<32x128xf32>
    %c0_9 = arith.constant 0 : index
    %c0_10 = arith.constant 0 : index
    %10 = vector.load %arg5[%c0_9, %c0_10] : memref<32x1xf32, #tpu.memory_space<vmem>>, vector<32x1xf32>
    %11 = vector.broadcast %10 : vector<32x1xf32> to vector<32x128xf32>
    %12 = arith.addf %9, %11 : vector<32x128xf32>
    %cst_11 = arith.constant 0.000000e+00 : f32
    %13 = vector.broadcast %cst_11 : f32 to vector<32x128xf32>
    %14 = arith.maximumf %12, %13 : vector<32x128xf32>
    %c0_12 = arith.constant 0 : index
    %c0_13 = arith.constant 0 : index
    %15 = vector.load %arg6[%c0_12, %c0_13] : memref<32x1xf32, #tpu.memory_space<vmem>>, vector<32x1xf32>
    %16 = vector.broadcast %15 : vector<32x1xf32> to vector<32x128xf32>
    %17 = arith.mulf %14, %16 : vector<32x128xf32>
    %cst_14 = arith.constant dense<0.000000e+00> : vector<128xf32>
    %18 = vector.multi_reduction <add>, %17, %cst_14 [0] : vector<32x128xf32> to vector<128xf32>
    %19 = vector.shape_cast %18 : vector<128xf32> to vector<1x128xf32>
    %c0_15 = arith.constant 0 : index
    %c0_16 = arith.constant 0 : index
    %20 = vector.load %arg7[%c0_15, %c0_16] : memref<1x1xf32, #tpu.memory_space<vmem>>, vector<1x1xf32>
    %21 = vector.broadcast %20 : vector<1x1xf32> to vector<1x128xf32>
    %22 = arith.addf %19, %21 : vector<1x128xf32>
    %c0_17 = arith.constant 0 : index
    %c0_18 = arith.constant 0 : index
    %23 = vector.load %arg8[%c0_17, %c0_18] : memref<1x128xf32, #tpu.memory_space<vmem>>, vector<1x128xf32>
    tpu.vector_store %arg8[%c0_17, %c0_18], %22 {strides = array<i32>} : memref<1x128xf32, #tpu.memory_space<vmem>>, vector<1x128xf32>,
    return
  }
  func.func @transform_0(%arg0: i32) -> (i32, i32) {
    %c0_i32 = arith.constant 0 : i32
    %c0_i32_0 = arith.constant 0 : i32
    return %c0_i32, %arg0 : i32, i32
  }
  func.func @transform_1(%arg0: i32) -> (i32, i32) {
    %c0_i32 = arith.constant 0 : i32
    %c0_i32_0 = arith.constant 0 : i32
    %c0_i32_1 = arith.constant 0 : i32
    return %c0_i32, %c0_i32_0 : i32, i32
  }
  func.func @transform_2(%arg0: i32) -> (i32, i32) {
    %c0_i32 = arith.constant 0 : i32
    %c0_i32_0 = arith.constant 0 : i32
    %c0_i32_1 = arith.constant 0 : i32
    return %c0_i32, %c0_i32_0 : i32, i32
  }
  func.func @transform_3(%arg0: i32) -> (i32, i32) {
    %c0_i32 = arith.constant 0 : i32
    %c0_i32_0 = arith.constant 0 : i32
    %c0_i32_1 = arith.constant 0 : i32
    return %c0_i32, %c0_i32_0 : i32, i32
  }
  func.func @transform_4(%arg0: i32) -> (i32, i32) {
    %c0_i32 = arith.constant 0 : i32
    %c0_i32_0 = arith.constant 0 : i32
    %c0_i32_1 = arith.constant 0 : i32
    return %c0_i32, %c0_i32_0 : i32, i32
  }
  func.func @transform_5(%arg0: i32) -> (i32, i32) {
    %c0_i32 = arith.constant 0 : i32
    %c0_i32_0 = arith.constant 0 : i32
    %c0_i32_1 = arith.constant 0 : i32
    return %c0_i32, %c0_i32_0 : i32, i32
  }
  func.func @transform_6(%arg0: i32) -> (i32, i32) {
    %c0_i32 = arith.constant 0 : i32
    %c0_i32_0 = arith.constant 0 : i32
    %c0_i32_1 = arith.constant 0 : i32
    return %c0_i32, %c0_i32_0 : i32, i32
  }
  func.func @transform_7(%arg0: i32) -> (i32, i32) {
    %c0_i32 = arith.constant 0 : i32
    %c0_i32_0 = arith.constant 0 : i32
    return %c0_i32, %arg0 : i32, i32
  }
}

</mosaic_0001>

<llo_original>
// kernel: tpu_custom_call.1
$region0: #{tpu_custom_call.1}
  #allocation0 [shape = 'u32[]', space=smem, size = 0x4, offset = 0x4, fixed_abs, tag = 'smem constant byte address 0x4 - core index']
  #allocation1 [shape = 'u32[144,128]{1,0:T(1,128)}', space=vmem, size = 0x12000, scoped, tag = 'internal scratch']
  #allocation2 [shape = 'f32[1,1]{1,0:T(1,128)S(1)}', space=vmem, size = 0x200, scoped, tag = 'scoped memory for tpu_custom_call.1']
  %s0 = inlined_call_operand.vmem [shape: f32[12,128], index: 0, kind: input, shape index: {}]
  %s1 = inlined_call_operand.vmem [shape: f32[32,12], index: 1, kind: input, shape index: {}]
  %s2 = inlined_call_operand.vmem [shape: f32[32,1], index: 2, kind: input, shape index: {}]
  %s3 = inlined_call_operand.vmem [shape: f32[32,32], index: 3, kind: input, shape index: {}]
  %s4 = inlined_call_operand.vmem [shape: f32[32,1], index: 4, kind: input, shape index: {}]
  %s5 = inlined_call_operand.vmem [shape: f32[32,1], index: 5, kind: input, shape index: {}]
  %s6 = inlined_call_operand.<no memory space> [shape: f32[1,1], index: 6, kind: input, shape index: {}]
  %s7 = inlined_call_operand.hbm [shape: f32[1,128], index: 7, kind: output, shape index: {}]
  %s8 = sld [smem:[#allocation0]]
  $region38: #{tpu_custom_call.1} parent=0
    _
  %s10 = ssub.s32 1, %s8
  %s11 = scalar_select 0, %s10, %s8
  %v12 = vstv %s6
  %13 = vst [vmem:[#allocation2] sm:$0x1] %v12
  $region1: #{tpu_custom_call.1} parent=0
    #allocation3 [shape = 'u8[512]{0}', space=vmem, size = 0x400, scoped, tag = 'output window, operand 0, single buffered']
    #allocation4 [shape = 's32[1]{0}', space=sflag, size = 0x4, scoped, tag = 'scoped memory for tpu_custom_call.1']
    %14 = vsyncpa [#allocation4], 0
    // Predicated region
    $region2: #{tpu_custom_call.1} parent=1 // pred_check
      _
    $region3: #{tpu_custom_call.1} parent=1 // pred_check_branch
      %16 = sbr.rel (0) target = $region5
    $region4: #{tpu_custom_call.1} parent=1 // pred_region
      _
    $region5: #{tpu_custom_call.1} parent=1 // pred_fallthru
      _
    // Predicated region
    $region6: #{tpu_custom_call.1} parent=1 // pred_check
      _
    $region7: #{tpu_custom_call.1} parent=1 // pred_check_branch
      %18 = sbr.rel (0) target = $region9
    $region8: #{tpu_custom_call.1} parent=1 // pred_region
      _
    $region9: #{tpu_custom_call.1} parent=1 // pred_fallthru
      _
    // Predicated region
    $region10: #{tpu_custom_call.1} parent=1 // pred_check
      _
    $region11: #{tpu_custom_call.1} parent=1 // pred_check_branch
      %20 = sbr.rel (0) target = $region13
    $region12: #{tpu_custom_call.1} parent=1 // pred_region
      _
    $region13: #{tpu_custom_call.1} parent=1 // pred_fallthru
      _
    // Predicated region
    $region14: #{tpu_custom_call.1} parent=1 // pred_check
      _
    $region15: #{tpu_custom_call.1} parent=1 // pred_check_branch
      %22 = sbr.rel (0) target = $region17
    $region16: #{tpu_custom_call.1} parent=1 // pred_region
      _
    $region17: #{tpu_custom_call.1} parent=1 // pred_fallthru
      _
    // Predicated region
    $region18: #{tpu_custom_call.1} parent=1 // pred_check
      _
    $region19: #{tpu_custom_call.1} parent=1 // pred_check_branch
      %24 = sbr.rel (0) target = $region21
    $region20: #{tpu_custom_call.1} parent=1 // pred_region
      _
    $region21: #{tpu_custom_call.1} parent=1 // pred_fallthru
      _
    // Predicated region
    $region22: #{tpu_custom_call.1} parent=1 // pred_check
      _
    $region23: #{tpu_custom_call.1} parent=1 // pred_check_branch
      %26 = sbr.rel (0) target = $region25
    $region24: #{tpu_custom_call.1} parent=1 // pred_region
      _
    $region25: #{tpu_custom_call.1} parent=1 // pred_fallthru
      _
    // Predicated region
    $region26: #{tpu_custom_call.1} parent=1 // pred_check
      _
    $region27: #{tpu_custom_call.1} parent=1 // pred_check_branch
      %28 = sbr.rel (0) target = $region29
    $region28: #{tpu_custom_call.1} parent=1 // pred_region
      _
    $region29: #{tpu_custom_call.1} parent=1 // pred_fallthru
      _
    %v29 = vld [vmem:[%s1] sm:$0xff]
    %v30 = vld [vmem:[%s1 + $0x8] sm:$0xff]
    %v31 = vld [vmem:[%s1 + $0x10] sm:$0xff]
    %v32 = vld [vmem:[%s1 + $0x18] sm:$0xff]
    %v33 = vld [vmem:[%s0] sm:$0xff]
    %v34 = vld [vmem:[%s0 + $0x8] sm:$0xf]
    %v35 = vld [vmem:[%s2] sm:$0xff]
    %v36 = vld [vmem:[%s2 + $0x8] sm:$0xff]
    %v37 = vld [vmem:[%s2 + $0x10] sm:$0xff]
    %v38 = vld [vmem:[%s2 + $0x18] sm:$0xff]
    %40 = vset.pattern.permute.xlu0 0
    %41 = vperm.xlu0 %40, %v35
    %v42 = vpop.permute.xlu0 %41
    %45 = vset.pattern.permute.xlu0 0
    %46 = vperm.xlu0 %45, %v36
    %v47 = vpop.permute.xlu0 %46
    %50 = vset.pattern.permute.xlu0 0
    %51 = vperm.xlu0 %50, %v37
    %v52 = vpop.permute.xlu0 %51
    %55 = vset.pattern.permute.xlu0 0
    %56 = vperm.xlu0 %55, %v38
    %v57 = vpop.permute.xlu0 %56
    %vm59 = vcmask 97280
    %v61 = vsel %vm59, %v29, 0
    %v64 = vsel %vm59, %v30, 0
    %v67 = vsel %vm59, %v31, 0
    %v70 = vsel %vm59, %v32, 0
    %vm72 = vcmask 1043456
    %v74 = vsel %vm72, %v34, 0
    %76 = vmatprep.subr.mxu0 0.0
    %77 = vmatpush1.msra.mxu0 %v33
    %78 = vmatprep.subr.mxu0 0.0
    %79 = vmatpush1.msra.mxu0 %v74
    %80 = vmatprep.subr.mxu0 0.0
    %81 = vmatpush1.msra.mxu0 0.0
    %82 = vmatprep.subr.mxu0 0.0
    %83 = vmatpush1.msra.mxu0 0.0
    %84 = vmatprep.subr.mxu0 0.0
    %85 = vmatpush1.msra.mxu0 0.0
    %86 = vmatprep.subr.mxu0 0.0
    %87 = vmatpush1.msra.mxu0 0.0
    %88 = vmatprep.subr.mxu0 0.0
    %89 = vmatpush1.msra.mxu0 0.0
    %90 = vmatprep.subr.mxu0 0.0
    %91 = vmatpush1.msra.mxu0 0.0
    %92 = vmatprep.subr.mxu0 0.0
    %93 = vmatpush1.msra.mxu0 0.0
    %94 = vmatprep.subr.mxu0 0.0
    %95 = vmatpush1.msra.mxu0 0.0
    %96 = vmatprep.subr.mxu0 0.0
    %97 = vmatpush1.msra.mxu0 0.0
    %98 = vmatprep.subr.mxu0 0.0
    %99 = vmatpush1.msra.mxu0 0.0
    %100 = vmatprep.subr.mxu0 0.0
    %101 = vmatpush1.msra.mxu0 0.0
    %102 = vmatprep.subr.mxu0 0.0
    %103 = vmatpush1.msra.mxu0 0.0
    %104 = vmatprep.subr.mxu0 0.0
    %105 = vmatpush1.msra.mxu0 0.0
    %106 = vmatprep.subr.mxu0 0.0
    %107 = vmatpush1.msra.mxu0 0.0
    %108 = vmatprep.subr.mxu0 0.0
    %109 = vmatpush1.msra.mxu0 0.0
    %110 = vmatprep.subr.mxu0 0.0
    %111 = vmatpush1.msra.mxu0 0.0
    %112 = vmatprep.subr.mxu0 0.0
    %113 = vmatpush1.msra.mxu0 0.0
    %114 = vmatprep.subr.mxu0 0.0
    %115 = vmatpush1.msra.mxu0 0.0
    %116 = vmatprep.subr.mxu0 0.0
    %117 = vmatpush1.msra.mxu0 0.0
    %118 = vmatprep.subr.mxu0 0.0
    %119 = vmatpush1.msra.mxu0 0.0
    %120 = vmatprep.subr.mxu0 0.0
    %121 = vmatpush1.msra.mxu0 0.0
    %122 = vmatprep.subr.mxu0 0.0
    %123 = vmatpush1.msra.mxu0 0.0
    %124 = vmatprep.subr.mxu0 0.0
    %125 = vmatpush1.msra.mxu0 0.0
    %126 = vmatprep.subr.mxu0 0.0
    %127 = vmatpush1.msra.mxu0 0.0
    %128 = vmatprep.subr.mxu0 0.0
    %129 = vmatpush1.msra.mxu0 0.0
    %130 = vmatprep.subr.mxu0 0.0
    %131 = vmatpush1.msra.mxu0 0.0
    %132 = vmatprep.subr.mxu0 0.0
    %133 = vmatpush1.msra.mxu0 0.0
    %134 = vmatprep.subr.mxu0 0.0
    %135 = vmatpush1.msra.mxu0 0.0
    %136 = vmatprep.subr.mxu0 0.0
    %137 = vmatpush1.msra.mxu0 0.0
    %138 = vmatprep.subr.mxu0 0.0
    %139 = vmatpush1.msra.mxu0 0.0
    %140 = vmatprep.mubr.f32.mxu0 0.0
    %141 = vmatmul.mubr.f32.gmra.mrb[0].mxu0 %v61
    %v142 = vpop.f32.mrb[0].mxu0
    %v143 = vadd.f32 %v42, %v142
    %v144 = vpop.f32.mrb[0].mxu0
    %145 = vmatprep.mubr.f32.mxu0 0.0
    %146 = vmatmul.mubr.f32.gmra.mrb[0].mxu0 %v64
    %v147 = vpop.f32.mrb[0].mxu0
    %v148 = vadd.f32 %v47, %v147
    %v149 = vpop.f32.mrb[0].mxu0
    %150 = vmatprep.mubr.f32.mxu0 0.0
    %151 = vmatmul.mubr.f32.gmra.mrb[0].mxu0 %v67
    %v152 = vpop.f32.mrb[0].mxu0
    %v153 = vadd.f32 %v52, %v152
    %v154 = vpop.f32.mrb[0].mxu0
    %155 = vmatprep.mubr.f32.mxu0 0.0
    %156 = vmatmul.mubr.f32.gmra.mrb[0].mxu0 %v70
    %v157 = vpop.f32.mrb[0].mxu0
    %v158 = vadd.f32 %v57, %v157
    %v159 = vpop.f32.mrb[0].mxu0
    %160 = vdwg.mxu0
    %v161 = vmax.f32 %v143, 0.0
    %v162 = vmax.f32 %v148, 0.0
    %v163 = vmax.f32 %v153, 0.0
    %v164 = vmax.f32 %v158, 0.0
    %v165 = vld [vmem:[%s3] sm:$0xff]
    %v166 = vld [vmem:[%s3 + $0x8] sm:$0xff]
    %v167 = vld [vmem:[%s3 + $0x10] sm:$0xff]
    %v168 = vld [vmem:[%s3 + $0x18] sm:$0xff]
    %v169 = vld [vmem:[%s4] sm:$0xff]
    %v170 = vld [vmem:[%s4 + $0x8] sm:$0xff]
    %v171 = vld [vmem:[%s4 + $0x10] sm:$0xff]
    %v172 = vld [vmem:[%s4 + $0x18] sm:$0xff]
    %174 = vset.pattern.permute.xlu0 0
    %175 = vperm.xlu0 %174, %v169
    %v176 = vpop.permute.xlu0 %175
    %179 = vset.pattern.permute.xlu0 0
    %180 = vperm.xlu0 %179, %v170
    %v181 = vpop.permute.xlu0 %180
    %184 = vset.pattern.permute.xlu0 0
    %185 = vperm.xlu0 %184, %v171
    %v186 = vpop.permute.xlu0 %185
    %189 = vset.pattern.permute.xlu0 0
    %190 = vperm.xlu0 %189, %v172
    %v191 = vpop.permute.xlu0 %190
    %vm193 = vcmask 261120
    %v195 = vsel %vm193, %v165, 0
    %v198 = vsel %vm193, %v166, 0
    %v201 = vsel %vm193, %v167, 0
    %v204 = vsel %vm193, %v168, 0
    %206 = vmatprep.subr.mxu0 0.0
    %207 = vmatpush1.msra.mxu0 %v161
    %208 = vmatprep.subr.mxu0 0.0
    %209 = vmatpush1.msra.mxu0 %v162
    %210 = vmatprep.subr.mxu0 0.0
    %211 = vmatpush1.msra.mxu0 %v163
    %212 = vmatprep.subr.mxu0 0.0
    %213 = vmatpush1.msra.mxu0 %v164
    %214 = vmatprep.subr.mxu0 0.0
    %215 = vmatpush1.msra.mxu0 0.0
    %216 = vmatprep.subr.mxu0 0.0
    %217 = vmatpush1.msra.mxu0 0.0
    %218 = vmatprep.subr.mxu0 0.0
    %219 = vmatpush1.msra.mxu0 0.0
    %220 = vmatprep.subr.mxu0 0.0
    %221 = vmatpush1.msra.mxu0 0.0
    %222 = vmatprep.subr.mxu0 0.0
    %223 = vmatpush1.msra.mxu0 0.0
    %224 = vmatprep.subr.mxu0 0.0
    %225 = vmatpush1.msra.mxu0 0.0
    %226 = vmatprep.subr.mxu0 0.0
    %227 = vmatpush1.msra.mxu0 0.0
    %228 = vmatprep.subr.mxu0 0.0
    %229 = vmatpush1.msra.mxu0 0.0
    %230 = vmatprep.subr.mxu0 0.0
    %231 = vmatpush1.msra.mxu0 0.0
    %232 = vmatprep.subr.mxu0 0.0
    %233 = vmatpush1.msra.mxu0 0.0
    %234 = vmatprep.subr.mxu0 0.0
    %235 = vmatpush1.msra.mxu0 0.0
    %236 = vmatprep.subr.mxu0 0.0
    %237 = vmatpush1.msra.mxu0 0.0
    %238 = vmatprep.subr.mxu0 0.0
    %239 = vmatpush1.msra.mxu0 0.0
    %240 = vmatprep.subr.mxu0 0.0
    %241 = vmatpush1.msra.mxu0 0.0
    %242 = vmatprep.subr.mxu0 0.0
    %243 = vmatpush1.msra.mxu0 0.0
    %244 = vmatprep.subr.mxu0 0.0
    %245 = vmatpush1.msra.mxu0 0.0
    %246 = vmatprep.subr.mxu0 0.0
    %247 = vmatpush1.msra.mxu0 0.0
    %248 = vmatprep.subr.mxu0 0.0
    %249 = vmatpush1.msra.mxu0 0.0
    %250 = vmatprep.subr.mxu0 0.0
    %251 = vmatpush1.msra.mxu0 0.0
    %252 = vmatprep.subr.mxu0 0.0
    %253 = vmatpush1.msra.mxu0 0.0
    %254 = vmatprep.subr.mxu0 0.0
    %255 = vmatpush1.msra.mxu0 0.0
    %256 = vmatprep.subr.mxu0 0.0
    %257 = vmatpush1.msra.mxu0 0.0
    %258 = vmatprep.subr.mxu0 0.0
    %259 = vmatpush1.msra.mxu0 0.0
    %260 = vmatprep.subr.mxu0 0.0
    %261 = vmatpush1.msra.mxu0 0.0
    %262 = vmatprep.subr.mxu0 0.0
    %263 = vmatpush1.msra.mxu0 0.0
    %264 = vmatprep.subr.mxu0 0.0
    %265 = vmatpush1.msra.mxu0 0.0
    %266 = vmatprep.subr.mxu0 0.0
    %267 = vmatpush1.msra.mxu0 0.0
    %268 = vmatprep.subr.mxu0 0.0
    %269 = vmatpush1.msra.mxu0 0.0
    %270 = vmatprep.mubr.f32.mxu0 0.0
    %271 = vmatmul.mubr.f32.gmra.mrb[0].mxu0 %v195
    %v272 = vpop.f32.mrb[0].mxu0
    %v273 = vadd.f32 %v176, %v272
    %v274 = vpop.f32.mrb[0].mxu0
    %275 = vmatprep.mubr.f32.mxu0 0.0
    %276 = vmatmul.mubr.f32.gmra.mrb[0].mxu0 %v198
    %v277 = vpop.f32.mrb[0].mxu0
    %v278 = vadd.f32 %v181, %v277
    %v279 = vpop.f32.mrb[0].mxu0
    %280 = vmatprep.mubr.f32.mxu0 0.0
    %281 = vmatmul.mubr.f32.gmra.mrb[0].mxu0 %v201
    %v282 = vpop.f32.mrb[0].mxu0
    %v283 = vadd.f32 %v186, %v282
    %v284 = vpop.f32.mrb[0].mxu0
    %285 = vmatprep.mubr.f32.mxu0 0.0
    %286 = vmatmul.mubr.f32.gmra.mrb[0].mxu0 %v204
    %v287 = vpop.f32.mrb[0].mxu0
    %v288 = vadd.f32 %v191, %v287
    %v289 = vpop.f32.mrb[0].mxu0
    %290 = vdwg.mxu0
    %v291 = vmax.f32 %v273, 0.0
    %v292 = vmax.f32 %v278, 0.0
    %v293 = vmax.f32 %v283, 0.0
    %v294 = vmax.f32 %v288, 0.0
    %v295 = vld [vmem:[%s5] sm:$0xff]
    %v296 = vld [vmem:[%s5 + $0x8] sm:$0xff]
    %v297 = vld [vmem:[%s5 + $0x10] sm:$0xff]
    %v298 = vld [vmem:[%s5 + $0x18] sm:$0xff]
    %300 = vset.pattern.permute.xlu0 0
    %301 = vperm.xlu0 %300, %v295
    %v302 = vpop.permute.xlu0 %301
    %305 = vset.pattern.permute.xlu0 0
    %306 = vperm.xlu0 %305, %v296
    %v307 = vpop.permute.xlu0 %306
    %310 = vset.pattern.permute.xlu0 0
    %311 = vperm.xlu0 %310, %v297
    %v312 = vpop.permute.xlu0 %311
    %315 = vset.pattern.permute.xlu0 0
    %316 = vperm.xlu0 %315, %v298
    %v317 = vpop.permute.xlu0 %316
    %v319 = vmul.f32 %v291, %v302
    %v320 = vmul.f32 %v292, %v307
    %v321 = vmul.f32 %v293, %v312
    %v322 = vmul.f32 %v294, %v317
    %v323 = vadd.f32 %v319, %v320
    %v324 = vadd.f32 %v323, %v321
    %v325 = vadd.f32 %v324, %v322
    %v326 = vrot.slane %v325, 4
    %v327 = vadd.f32 %v325, %v326
    %v328 = vrot.slane %v327, 2
    %v329 = vadd.f32 %v327, %v328
    %v330 = vrot.slane %v329, 1
    %v331 = vadd.f32 %v329, %v330
    %v332 = vld [vmem:[#allocation2] sm:$0x1]
    %334 = vset.pattern.permute.xlu0 0
    %335 = vperm.xlu0 %334, %v332
    %v336 = vpop.permute.xlu0 %335
    %v338 = vlaneseq
    %v339 = vshrl.u32 %v338, 7
    %v340 = vsub.s32 0, %v339
    %v341 = vrot.slane %v336, %v340
    %v342 = vadd.f32 %v331, %v341
    %343 = vst [vmem:[#allocation3] sm:$0x1] %v342
    // Predicated region
    $region30: #{tpu_custom_call.1} parent=1 // pred_check
      _
    $region31: #{tpu_custom_call.1} parent=1 // pred_check_branch
      %345 = sbr.rel (0) target = $region33
    $region32: #{tpu_custom_call.1} parent=1 // pred_region
      %s347 = ssub.s32 16, 16
      %348 = vsyncadd [#allocation4], %s347
      %s350 = sshll.u32 [#allocation3], 4
      %s351 = int_to_ptr.vmem [resolvable:$true] %s350
      %353 = dma.vmem_to_hbm [thread:$0]  %s351, 16, %s7, [#allocation4]
    $region33: #{tpu_custom_call.1} parent=1 // pred_fallthru
      _
    // Predicated region
    $region34: #{tpu_custom_call.1} parent=1 // pred_check
      _
    $region35: #{tpu_custom_call.1} parent=1 // pred_check_branch
      %355 = sbr.rel (0) target = $region37
    $region36: #{tpu_custom_call.1} parent=1 // pred_region
      %356 = dma.done [#allocation4], 16
    $region37: #{tpu_custom_call.1} parent=1 // pred_fallthru
      _
    %357 = vsyncpa [#allocation4], 1

</llo_original>
